<compile_context>
chip_gen: v6e
topology: v6e:2x2x1
jax: 0.10.0
libtpu: 0.0.40
codegen_flags: <defaults>
</compile_context>

<pallas_src>
import functools

import jax
import jax.numpy as jnp
from jax.experimental import pallas as pl
from jax.experimental.pallas import tpu as pltpu

N_PAD = 128  # lane-dense padded width of the fc5 output


# ---------------------------------------------------------------------------
# Fused Pallas kernel: fc4 -> LeakyReLU -> (dropout=id) -> [BN folded] -> fc5
#                      -> LeakyReLU -> (dropout=id)
# ---------------------------------------------------------------------------

def head8_kernel(x_ref, w4_ref, b4_ref, w5_ref, b5_ref, o_ref):
    # fc4: (TB, 64) @ (64, 64) + (1, 64); accumulate in f32 regardless of x dtype.
    x = x_ref[...].astype(jnp.float32)
    h = jnp.dot(x, w4_ref[...], preferred_element_type=jnp.float32) + b4_ref[...]
    # LeakyReLU (negative_slope = 0.01)
    h = jnp.maximum(h, 0.01 * h)
    # Dropout -> identity (eval).  BatchNorm1d (eval) is folded into w5/b5.
    # fc5 (BN-folded, lane-padded): (TB, 64) @ (64, 128) + (1, 128)
    z = jnp.dot(h, w5_ref[...], preferred_element_type=jnp.float32) + b5_ref[...]
    # LeakyReLU, Dropout -> identity.  Lane-dense (TB, 128) store.
    o_ref[...] = jnp.maximum(z, 0.01 * z)


# ---------------------------------------------------------------------------
# Parameters (PyTorch-shaped) and one-time layout preparation
# ---------------------------------------------------------------------------

def init_params(key, dtype=jnp.float32):
    """PyTorch-shaped parameters; BN stats randomized so the BN path is exercised."""
    ks = jax.random.split(key, 8)

    def u(k, shape, fan_in):
        bound = 1.0 / jnp.sqrt(jnp.asarray(fan_in, dtype))
        return jax.random.uniform(k, shape, dtype, -bound, bound)

    return dict(
        fc4_w=u(ks[0], (64, 64), 64),          # Linear(64, 64)
        fc4_b=u(ks[1], (64,), 64),
        fc5_w=u(ks[2], (2, 64), 64),           # Linear(64, 2)
        fc5_b=u(ks[3], (2,), 64),
        bn_gamma=1.0 + 0.1 * jax.random.normal(ks[4], (64,), dtype),
        bn_beta=0.1 * jax.random.normal(ks[5], (64,), dtype),
        bn_mean=0.1 * jax.random.normal(ks[6], (64,), dtype),
        bn_var=jnp.abs(jax.random.normal(ks[7], (64,), dtype)) + 0.5,
        bn_eps=1e-5,
    )


def prepare_params(params):
    """One-time weight layout prep (hoisted out of the per-call forward path).

    * fc4 weight transposed to (in, out).
    * BatchNorm eval affine folded into fc5:
        BN(h) = h * scale + shift  with  scale = gamma / sqrt(var + eps),
                                         shift = beta - mean * scale
        fc5(BN(h)) = h @ (scale[:,None] * w5) + (shift @ w5 + b5)
    * fc5 weight/bias zero-padded to N_PAD=128 lanes for an unmasked output store.
    """
    f32 = jnp.float32
    scale = (params["bn_gamma"] /
             jnp.sqrt(params["bn_var"] + params["bn_eps"])).astype(f32)
    shift = (params["bn_beta"] - params["bn_mean"] * scale).astype(f32)

    w5 = params["fc5_w"].T.astype(f32)                   # (64, 2)
    w5_fold = scale[:, None] * w5                        # (64, 2)
    b5_fold = shift @ w5 + params["fc5_b"].astype(f32)   # (2,)

    w5_pad = jnp.zeros((64, N_PAD), f32).at[:, :2].set(w5_fold)
    b5_pad = jnp.zeros((1, N_PAD), f32).at[:, :2].set(b5_fold)

    return dict(
        w4=params["fc4_w"].T.astype(f32),                 # (64, 64)
        b4=params["fc4_b"].reshape(1, 64).astype(f32),    # (1, 64)
        w5=w5_pad,                                        # (64, 128), BN folded
        b5=b5_pad,                                        # (1, 128),  BN folded
    )


# ---------------------------------------------------------------------------
# Forward wrapper: batch-tiled grid, weights VMEM-resident, lane-dense output
# ---------------------------------------------------------------------------

def _round_up(n, m):
    return ((n + m - 1) // m) * m


@functools.partial(jax.jit, static_argnames=("block_b", "input_dtype"))
def head8_forward(x, prepped, *, block_b=2048, input_dtype=jnp.float32):
    """head8 forward.  x: (B, 64).  Returns (B, 2) float32.

    For the large-B, HBM-read-bound regime pass input_dtype=jnp.bfloat16
    (halves the x DMA bytes; matmul accumulation stays f32 in-kernel).
    """
    B = x.shape[0]
    f32 = jnp.float32

    # Tile the batch.  Pad B up to a multiple of the tile (and of 8 sublanes);
    # pad rows are sliced off below.
    tb = min(block_b, _round_up(B, 8))
    b_pad = _round_up(B, tb)
    if b_pad != B:
        x = jnp.pad(x, ((0, b_pad - B), (0, 0)))
    x = x.astype(input_dtype)

    grid = (pl.cdiv(b_pad, tb),)

    itemsize_x = jnp.dtype(input_dtype).itemsize
    flops = 2 * b_pad * 64 * 64 + 2 * b_pad * 64 * N_PAD + 6 * b_pad * 64 + 4 * b_pad * N_PAD
    bytes_accessed = (itemsize_x * b_pad * 64                       # x read
                      + 4 * (64 * 64 + 64 + 64 * N_PAD + N_PAD)     # weights/biases
                      + 4 * b_pad * N_PAD)                          # output write

    out = pl.pallas_call(
        head8_kernel,
        out_shape=jax.ShapeDtypeStruct((b_pad, N_PAD), f32),
        grid=grid,
        in_specs=[
            pl.BlockSpec((tb, 64), lambda i: (i, 0)),        # x tile
            pl.BlockSpec((64, 64), lambda i: (0, 0)),        # w4 (resident)
            pl.BlockSpec((1, 64), lambda i: (0, 0)),         # b4
            pl.BlockSpec((64, N_PAD), lambda i: (0, 0)),     # w5 (BN folded, padded)
            pl.BlockSpec((1, N_PAD), lambda i: (0, 0)),      # b5
        ],
        out_specs=pl.BlockSpec((tb, N_PAD), lambda i: (i, 0)),
        compiler_params=pltpu.CompilerParams(
            dimension_semantics=("parallel",)),              # v7x: 2 TCs; no-op v5e/v6e
        cost_estimate=pl.CostEstimate(
            flops=flops, transcendentals=0, bytes_accessed=bytes_accessed),
    )(x, prepped["w4"], prepped["b4"], prepped["w5"], prepped["b5"])

    # Drop batch padding and the lane padding of the fc5 output.
    return out[:B, :2]


# ---------------------------------------------------------------------------
# Pure-JAX reference (eval-mode semantics) for a correctness cross-check
# ---------------------------------------------------------------------------

def head8_reference(x, params):
    def leaky(v):
        return jnp.where(v > 0, v, 0.01 * v)

    h = leaky(x @ params["fc4_w"].T + params["fc4_b"])
    # dropout = identity (eval)
    h = ((h - params["bn_mean"]) /
         jnp.sqrt(params["bn_var"] + params["bn_eps"]) *
         params["bn_gamma"] + params["bn_beta"])
    h = leaky(h @ params["fc5_w"].T + params["fc5_b"])
    return h


if __name__ == "__main__":
    B = 8
    key = jax.random.PRNGKey(0)
    kx, kp = jax.random.split(key)
    x = jax.random.normal(kx, (B, 64), dtype=jnp.float32)

    params = init_params(kp)
    prepped = prepare_params(params)   # one-time; not part of per-call forward

    out = jax.block_until_ready(head8_forward(x, prepped))
    ref = jax.block_until_ready(head8_reference(x, params))

    assert out.shape == (B, 2), out.shape
    assert jnp.allclose(out, ref, atol=1e-4, rtol=1e-4), (out, ref)
    print("KERNEL_OK")
</pallas_src>

<mosaic_0001>
module attributes {stable_mosaic.version = 11 : i64} {
  func.func @head8_kernel(%arg0: i32, %arg1: memref<8x64xf32, #tpu.memory_space<vmem>>, %arg2: memref<64x64xf32, #tpu.memory_space<vmem>>, %arg3: memref<1x64xf32, #tpu.memory_space<vmem>>, %arg4: memref<64x128xf32, #tpu.memory_space<vmem>>, %arg5: memref<1x128xf32, #tpu.memory_space<vmem>>, %arg6: memref<8x128xf32, #tpu.memory_space<vmem>>) attributes {dimension_semantics = [#tpu.dimension_semantics<parallel>], iteration_bounds = array<i64: 1>, scalar_prefetch = 0 : i64, scratch_operands = 0 : i64, tpu.core_type = #tpu.core_type<tc>, window_params = [{transform_indices = @transform_0, window_bounds = array<i64: 8, 64>}, {pipeline_mode = #tpu.pipeline_mode<synchronous>, transform_indices = @transform_1, window_bounds = array<i64: 64, 64>}, {pipeline_mode = #tpu.pipeline_mode<synchronous>, transform_indices = @transform_2, window_bounds = array<i64: 1, 64>}, {pipeline_mode = #tpu.pipeline_mode<synchronous>, transform_indices = @transform_3, window_bounds = array<i64: 64, 128>}, {pipeline_mode = #tpu.pipeline_mode<synchronous>, transform_indices = @transform_4, window_bounds = array<i64: 1, 128>}, {transform_indices = @transform_5, window_bounds = array<i64: 8, 128>}]} {
    %c0 = arith.constant 0 : index
    %c0_0 = arith.constant 0 : index
    %0 = vector.load %arg1[%c0, %c0_0] : memref<8x64xf32, #tpu.memory_space<vmem>>, vector<8x64xf32>
    %c0_1 = arith.constant 0 : index
    %c0_2 = arith.constant 0 : index
    %1 = vector.load %arg2[%c0_1, %c0_2] : memref<64x64xf32, #tpu.memory_space<vmem>>, vector<64x64xf32>
    %cst = arith.constant dense<0.000000e+00> : vector<8x64xf32>
    %2 = tpu.matmul %0, %1, %cst {dimension_numbers = #tpu.dot_dimension_numbers<[1], [0], [0], [1], [0, 0, 1, 1], [], []>} : vector<8x64xf32>, vector<64x64xf32>, vector<8x64xf32> -> vector<8x64xf32>
    %c0_3 = arith.constant 0 : index
    %c0_4 = arith.constant 0 : index
    %3 = vector.load %arg3[%c0_3, %c0_4] : memref<1x64xf32, #tpu.memory_space<vmem>>, vector<1x64xf32>
    %4 = vector.broadcast %3 : vector<1x64xf32> to vector<8x64xf32>
    %5 = arith.addf %2, %4 : vector<8x64xf32>
    %cst_5 = arith.constant 0.00999999977 : f32
    %6 = vector.broadcast %cst_5 : f32 to vector<8x64xf32>
    %7 = arith.mulf %6, %5 : vector<8x64xf32>
    %8 = arith.maximumf %5, %7 : vector<8x64xf32>
    %c0_6 = arith.constant 0 : index
    %c0_7 = arith.constant 0 : index
    %9 = vector.load %arg4[%c0_6, %c0_7] : memref<64x128xf32, #tpu.memory_space<vmem>>, vector<64x128xf32>
    %cst_8 = arith.constant dense<0.000000e+00> : vector<8x128xf32>
    %10 = tpu.matmul %8, %9, %cst_8 {dimension_numbers = #tpu.dot_dimension_numbers<[1], [0], [0], [1], [0, 0, 1, 1], [], []>} : vector<8x64xf32>, vector<64x128xf32>, vector<8x128xf32> -> vector<8x128xf32>
    %c0_9 = arith.constant 0 : index
    %c0_10 = arith.constant 0 : index
    %11 = vector.load %arg5[%c0_9, %c0_10] : memref<1x128xf32, #tpu.memory_space<vmem>>, vector<1x128xf32>
    %12 = vector.broadcast %11 : vector<1x128xf32> to vector<8x128xf32>
    %13 = arith.addf %10, %12 : vector<8x128xf32>
    %cst_11 = arith.constant 0.00999999977 : f32
    %14 = vector.broadcast %cst_11 : f32 to vector<8x128xf32>
    %15 = arith.mulf %14, %13 : vector<8x128xf32>
    %16 = arith.maximumf %13, %15 : vector<8x128xf32>
    %c0_12 = arith.constant 0 : index
    %c0_13 = arith.constant 0 : index
    %17 = vector.load %arg6[%c0_12, %c0_13] : memref<8x128xf32, #tpu.memory_space<vmem>>, vector<8x128xf32>
    tpu.vector_store %arg6[%c0_12, %c0_13], %16 {strides = array<i32>} : memref<8x128xf32, #tpu.memory_space<vmem>>, vector<8x128xf32>,
    return
  }
  func.func @transform_0(%arg0: i32) -> (i32, i32) {
    %c0_i32 = arith.constant 0 : i32
    %c0_i32_0 = arith.constant 0 : i32
    return %arg0, %c0_i32 : i32, i32
  }
  func.func @transform_1(%arg0: i32) -> (i32, i32) {
    %c0_i32 = arith.constant 0 : i32
    %c0_i32_0 = arith.constant 0 : i32
    %c0_i32_1 = arith.constant 0 : i32
    return %c0_i32, %c0_i32_0 : i32, i32
  }
  func.func @transform_2(%arg0: i32) -> (i32, i32) {
    %c0_i32 = arith.constant 0 : i32
    %c0_i32_0 = arith.constant 0 : i32
    %c0_i32_1 = arith.constant 0 : i32
    return %c0_i32, %c0_i32_0 : i32, i32
  }
  func.func @transform_3(%arg0: i32) -> (i32, i32) {
    %c0_i32 = arith.constant 0 : i32
    %c0_i32_0 = arith.constant 0 : i32
    %c0_i32_1 = arith.constant 0 : i32
    return %c0_i32, %c0_i32_0 : i32, i32
  }
  func.func @transform_4(%arg0: i32) -> (i32, i32) {
    %c0_i32 = arith.constant 0 : i32
    %c0_i32_0 = arith.constant 0 : i32
    %c0_i32_1 = arith.constant 0 : i32
    return %c0_i32, %c0_i32_0 : i32, i32
  }
  func.func @transform_5(%arg0: i32) -> (i32, i32) {
    %c0_i32 = arith.constant 0 : i32
    %c0_i32_0 = arith.constant 0 : i32
    return %arg0, %c0_i32 : i32, i32
  }
}

</mosaic_0001>

<llo_original>
// kernel: head8_forward.1
$region0: #{head8_forward.1}
  #allocation0 [shape = 'u32[]', space=smem, size = 0x4, offset = 0x4, fixed_abs, tag = 'smem constant byte address 0x4 - core index']
  #allocation1 [shape = 'u32[144,128]{1,0:T(1,128)}', space=vmem, size = 0x12000, scoped, tag = 'internal scratch']
  %s0 = inlined_call_operand.hbm [shape: f32[8,64], index: 0, kind: input, shape index: {}]
  %s1 = inlined_call_operand.hbm [shape: f32[64,64], index: 1, kind: input, shape index: {}]
  %s2 = inlined_call_operand.vmem [shape: f32[1,64], index: 2, kind: input, shape index: {}]
  %s3 = inlined_call_operand.hbm [shape: f32[64,128], index: 3, kind: input, shape index: {}]
  %s4 = inlined_call_operand.vmem [shape: f32[1,128], index: 4, kind: input, shape index: {}]
  %s5 = inlined_call_operand.vmem [shape: f32[8,128], index: 5, kind: output, shape index: {}]
  %s6 = sld [smem:[#allocation0]]
  $region42: #{head8_forward.1} parent=0
    _
  %s8 = ssub.s32 1, %s6
  %s9 = scalar_select 0, %s8, %s6
  $region1: #{head8_forward.1} parent=0
    #allocation2 [shape = 'u8[4096]{0}', space=vmem, size = 0x1000, scoped, tag = 'input window, operand 0, single buffered']
    #allocation3 [shape = 's32[1]{0}', space=sflag, size = 0x4, scoped, tag = 'scoped memory for head8_forward.1']
    #allocation4 [shape = 'u8[32768]{0}', space=vmem, size = 0x8000, scoped, tag = 'input window, operand 1, single buffered']
    #allocation5 [shape = 's32[1]{0}', space=sflag, size = 0x4, scoped, tag = 'scoped memory for head8_forward.1']
    #allocation6 [shape = 'u8[32768]{0}', space=vmem, size = 0x8000, scoped, tag = 'input window, operand 3, single buffered']
    %10 = vsyncpa [#allocation3], 0
    %11 = vsyncpa [#allocation5], 0
    // Predicated region
    $region2: #{head8_forward.1} parent=1 // pred_check
      _
    $region3: #{head8_forward.1} parent=1 // pred_check_branch
      %13 = sbr.rel (0) target = $region5
    $region4: #{head8_forward.1} parent=1 // pred_region
      %s15 = ssub.s32 128, 128
      %16 = vsyncadd [#allocation3], %s15
      %s18 = sshll.u32 [#allocation2], 4
      %s19 = int_to_ptr.vmem [resolvable:$true] %s18
      %21 = dma.hbm_to_vmem [thread:$0]  %s0, 128, %s19, [#allocation3]
    $region5: #{head8_forward.1} parent=1 // pred_fallthru
      _
    // Predicated region
    $region6: #{head8_forward.1} parent=1 // pred_check
      _
    $region7: #{head8_forward.1} parent=1 // pred_check_branch
      %23 = sbr.rel (0) target = $region9
    $region8: #{head8_forward.1} parent=1 // pred_region
      %s25 = ssub.s32 1024, 1024
      %26 = vsyncadd [#allocation5], %s25
      %s27 = sshll.u32 [#allocation4], 4
      %s28 = int_to_ptr.vmem [resolvable:$true] %s27
      %33 = dma.hbm_to_vmem [thread:$0]  %s1, 1024, %s28, [#allocation5], 128, 128, 8
    $region9: #{head8_forward.1} parent=1 // pred_fallthru
      _
    // Predicated region
    $region10: #{head8_forward.1} parent=1 // pred_check
      _
    $region11: #{head8_forward.1} parent=1 // pred_check_branch
      %35 = sbr.rel (0) target = $region13
    $region12: #{head8_forward.1} parent=1 // pred_region
      _
    $region13: #{head8_forward.1} parent=1 // pred_fallthru
      _
    // Predicated region
    $region14: #{head8_forward.1} parent=1 // pred_check
      _
    $region15: #{head8_forward.1} parent=1 // pred_check_branch
      %37 = sbr.rel (0) target = $region17
    $region16: #{head8_forward.1} parent=1 // pred_region
      %s39 = ssub.s32 1024, 1024
      %40 = vsyncadd [#allocation5], %s39
      %s41 = sshll.u32 [#allocation6], 4
      %s42 = int_to_ptr.vmem [resolvable:$true] %s41
      %47 = dma.hbm_to_vmem [thread:$0]  %s3, 1024, %s42, [#allocation5], 128, 128, 8
    $region17: #{head8_forward.1} parent=1 // pred_fallthru
      _
    // Predicated region
    $region18: #{head8_forward.1} parent=1 // pred_check
      _
    $region19: #{head8_forward.1} parent=1 // pred_check_branch
      %49 = sbr.rel (0) target = $region21
    $region20: #{head8_forward.1} parent=1 // pred_region
      _
    $region21: #{head8_forward.1} parent=1 // pred_fallthru
      _
    // Predicated region
    $region22: #{head8_forward.1} parent=1 // pred_check
      _
    $region23: #{head8_forward.1} parent=1 // pred_check_branch
      %51 = sbr.rel (0) target = $region25
    $region24: #{head8_forward.1} parent=1 // pred_region
      %52 = dma.done [#allocation3], 128
    $region25: #{head8_forward.1} parent=1 // pred_fallthru
      _
    // Predicated region
    $region26: #{head8_forward.1} parent=1 // pred_check
      _
    $region27: #{head8_forward.1} parent=1 // pred_check_branch
      %54 = sbr.rel (0) target = $region29
    $region28: #{head8_forward.1} parent=1 // pred_region
      %55 = dma.done [#allocation5], 1024
    $region29: #{head8_forward.1} parent=1 // pred_fallthru
      _
    // Predicated region
    $region30: #{head8_forward.1} parent=1 // pred_check
      _
    $region31: #{head8_forward.1} parent=1 // pred_check_branch
      %57 = sbr.rel (0) target = $region33
    $region32: #{head8_forward.1} parent=1 // pred_region
      %58 = dma.done [#allocation5], 1024
    $region33: #{head8_forward.1} parent=1 // pred_fallthru
      _
    %v59 = vld [vmem:[#allocation2] sm:$0xff]
    %v60 = vld [vmem:[#allocation4] sm:$0xff]
    %v61 = vld [vmem:[#allocation4 + $0x8] sm:$0xff]
    %v62 = vld [vmem:[#allocation4 + $0x10] sm:$0xff]
    %v63 = vld [vmem:[#allocation4 + $0x18] sm:$0xff]
    %v64 = vld [vmem:[#allocation4 + $0x20] sm:$0xff]
    %v65 = vld [vmem:[#allocation4 + $0x28] sm:$0xff]
    %v66 = vld [vmem:[#allocation4 + $0x30] sm:$0xff]
    %v67 = vld [vmem:[#allocation4 + $0x38] sm:$0xff]
    %v68 = vld [vmem:[%s2] sm:$0x1]
    %v70 = vlaneseq
    %v71 = vshrl.u32 %v70, 7
    %v72 = vsub.s32 0, %v71
    %v73 = vrot.slane %v68, %v72
    %vm75 = vcmask 523264
    %v77 = vsel %vm75, %v59, 0
    %79 = vmatprep.subr.mxu0 0.0
    %80 = vmatpush1.msra.mxu0 0.0
    %81 = vmatprep.subr.mxu0 0.0
    %82 = vmatpush1.msra.mxu0 0.0
    %83 = vmatprep.subr.mxu0 0.0
    %84 = vmatpush1.msra.mxu0 0.0
    %85 = vmatprep.subr.mxu0 0.0
    %86 = vmatpush1.msra.mxu0 0.0
    %87 = vmatprep.subr.mxu0 0.0
    %88 = vmatpush1.msra.mxu0 0.0
    %89 = vmatprep.subr.mxu0 0.0
    %90 = vmatpush1.msra.mxu0 0.0
    %91 = vmatprep.subr.mxu0 0.0
    %92 = vmatpush1.msra.mxu0 0.0
    %93 = vmatprep.subr.mxu0 0.0
    %94 = vmatpush1.msra.mxu0 0.0
    %95 = vmatprep.subr.mxu0 0.0
    %96 = vmatpush1.msra.mxu0 %v67
    %97 = vmatprep.subr.mxu0 0.0
    %98 = vmatpush1.msra.mxu0 %v66
    %99 = vmatprep.subr.mxu0 0.0
    %100 = vmatpush1.msra.mxu0 %v65
    %101 = vmatprep.subr.mxu0 0.0
    %102 = vmatpush1.msra.mxu0 %v64
    %103 = vmatprep.subr.mxu0 0.0
    %104 = vmatpush1.msra.mxu0 %v63
    %105 = vmatprep.subr.mxu0 0.0
    %106 = vmatpush1.msra.mxu0 %v62
    %107 = vmatprep.subr.mxu0 0.0
    %108 = vmatpush1.msra.mxu0 %v61
    %109 = vmatprep.subr.mxu0 0.0
    %110 = vmatpush1.msra.mxu0 %v60
    %111 = vmatprep.subr.mxu0 0.0
    %112 = vmatpush2.msra.mxu0 0.0
    %113 = vmatprep.subr.mxu0 0.0
    %114 = vmatpush2.msra.mxu0 0.0
    %115 = vmatprep.subr.mxu0 0.0
    %116 = vmatpush2.msra.mxu0 0.0
    %117 = vmatprep.subr.mxu0 0.0
    %118 = vmatpush2.msra.mxu0 0.0
    %119 = vmatprep.subr.mxu0 0.0
    %120 = vmatpush2.msra.mxu0 0.0
    %121 = vmatprep.subr.mxu0 0.0
    %122 = vmatpush2.msra.mxu0 0.0
    %123 = vmatprep.subr.mxu0 0.0
    %124 = vmatpush2.msra.mxu0 0.0
    %125 = vmatprep.subr.mxu0 0.0
    %126 = vmatpush2.msra.mxu0 0.0
    %127 = vmatprep.subr.mxu0 0.0
    %128 = vmatpush2.msra.mxu0 0.0
    %129 = vmatprep.subr.mxu0 0.0
    %130 = vmatpush2.msra.mxu0 0.0
    %131 = vmatprep.subr.mxu0 0.0
    %132 = vmatpush2.msra.mxu0 0.0
    %133 = vmatprep.subr.mxu0 0.0
    %134 = vmatpush2.msra.mxu0 0.0
    %135 = vmatprep.subr.mxu0 0.0
    %136 = vmatpush2.msra.mxu0 0.0
    %137 = vmatprep.subr.mxu0 0.0
    %138 = vmatpush2.msra.mxu0 0.0
    %139 = vmatprep.subr.mxu0 0.0
    %140 = vmatpush2.msra.mxu0 0.0
    %141 = vmatprep.subr.mxu0 0.0
    %142 = vmatpush2.msra.mxu0 0.0
    %143 = vmatprep.mubr.f32.mxu0 0.0
    %144 = vmatmul.mubr.f32.gmra.mxu0 %v77
    %v145 = vpop.f32.mrf.mxu0
    %v146 = vadd.f32 %v73, %v145
    %v147 = vpop.f32.mrf.mxu0
    %148 = vdwg.mxu0
    %v149 = vmul.f32 %v146, 0.01
    %v150 = vmax.f32 %v146, %v149
    %v151 = vld [vmem:[#allocation6] sm:$0xff]
    %v152 = vld [vmem:[#allocation6 + $0x8] sm:$0xff]
    %v153 = vld [vmem:[#allocation6 + $0x10] sm:$0xff]
    %v154 = vld [vmem:[#allocation6 + $0x18] sm:$0xff]
    %v155 = vld [vmem:[#allocation6 + $0x20] sm:$0xff]
    %v156 = vld [vmem:[#allocation6 + $0x28] sm:$0xff]
    %v157 = vld [vmem:[#allocation6 + $0x30] sm:$0xff]
    %v158 = vld [vmem:[#allocation6 + $0x38] sm:$0xff]
    %v159 = vld [vmem:[%s4] sm:$0x1]
    %v161 = vlaneseq
    %v162 = vshrl.u32 %v161, 7
    %v163 = vsub.s32 0, %v162
    %v164 = vrot.slane %v159, %v163
    %v167 = vsel %vm75, %v150, 0
    %169 = vmatprep.subr.mxu0 0.0
    %170 = vmatpush1.msra.mxu0 0.0
    %171 = vmatprep.subr.mxu0 0.0
    %172 = vmatpush1.msra.mxu0 0.0
    %173 = vmatprep.subr.mxu0 0.0
    %174 = vmatpush1.msra.mxu0 0.0
    %175 = vmatprep.subr.mxu0 0.0
    %176 = vmatpush1.msra.mxu0 0.0
    %177 = vmatprep.subr.mxu0 0.0
    %178 = vmatpush1.msra.mxu0 0.0
    %179 = vmatprep.subr.mxu0 0.0
    %180 = vmatpush1.msra.mxu0 0.0
    %181 = vmatprep.subr.mxu0 0.0
    %182 = vmatpush1.msra.mxu0 0.0
    %183 = vmatprep.subr.mxu0 0.0
    %184 = vmatpush1.msra.mxu0 0.0
    %185 = vmatprep.subr.mxu0 0.0
    %186 = vmatpush1.msra.mxu0 %v158
    %187 = vmatprep.subr.mxu0 0.0
    %188 = vmatpush1.msra.mxu0 %v157
    %189 = vmatprep.subr.mxu0 0.0
    %190 = vmatpush1.msra.mxu0 %v156
    %191 = vmatprep.subr.mxu0 0.0
    %192 = vmatpush1.msra.mxu0 %v155
    %193 = vmatprep.subr.mxu0 0.0
    %194 = vmatpush1.msra.mxu0 %v154
    %195 = vmatprep.subr.mxu0 0.0
    %196 = vmatpush1.msra.mxu0 %v153
    %197 = vmatprep.subr.mxu0 0.0
    %198 = vmatpush1.msra.mxu0 %v152
    %199 = vmatprep.subr.mxu0 0.0
    %200 = vmatpush1.msra.mxu0 %v151
    %201 = vmatprep.subr.mxu0 0.0
    %202 = vmatpush2.msra.mxu0 0.0
    %203 = vmatprep.subr.mxu0 0.0
    %204 = vmatpush2.msra.mxu0 0.0
    %205 = vmatprep.subr.mxu0 0.0
    %206 = vmatpush2.msra.mxu0 0.0
    %207 = vmatprep.subr.mxu0 0.0
    %208 = vmatpush2.msra.mxu0 0.0
    %209 = vmatprep.subr.mxu0 0.0
    %210 = vmatpush2.msra.mxu0 0.0
    %211 = vmatprep.subr.mxu0 0.0
    %212 = vmatpush2.msra.mxu0 0.0
    %213 = vmatprep.subr.mxu0 0.0
    %214 = vmatpush2.msra.mxu0 0.0
    %215 = vmatprep.subr.mxu0 0.0
    %216 = vmatpush2.msra.mxu0 0.0
    %217 = vmatprep.subr.mxu0 0.0
    %218 = vmatpush2.msra.mxu0 0.0
    %219 = vmatprep.subr.mxu0 0.0
    %220 = vmatpush2.msra.mxu0 0.0
    %221 = vmatprep.subr.mxu0 0.0
    %222 = vmatpush2.msra.mxu0 0.0
    %223 = vmatprep.subr.mxu0 0.0
    %224 = vmatpush2.msra.mxu0 0.0
    %225 = vmatprep.subr.mxu0 0.0
    %226 = vmatpush2.msra.mxu0 0.0
    %227 = vmatprep.subr.mxu0 0.0
    %228 = vmatpush2.msra.mxu0 0.0
    %229 = vmatprep.subr.mxu0 0.0
    %230 = vmatpush2.msra.mxu0 0.0
    %231 = vmatprep.subr.mxu0 0.0
    %232 = vmatpush2.msra.mxu0 0.0
    %233 = vmatprep.mubr.f32.mxu0 0.0
    %234 = vmatmul.mubr.f32.gmra.mxu0 %v167
    %v235 = vpop.f32.mrf.mxu0
    %v236 = vadd.f32 %v164, %v235
    %v237 = vpop.f32.mrf.mxu0
    %238 = vdwg.mxu0
    %v239 = vmul.f32 %v236, 0.01
    %v240 = vmax.f32 %v236, %v239
    %241 = vst [vmem:[%s5] sm:$0xff] %v240
    // Predicated region
    $region34: #{head8_forward.1} parent=1 // pred_check
      _
    $region35: #{head8_forward.1} parent=1 // pred_check_branch
      %243 = sbr.rel (0) target = $region37
    $region36: #{head8_forward.1} parent=1 // pred_region
      _
    $region37: #{head8_forward.1} parent=1 // pred_fallthru
      _
    // Predicated region
    $region38: #{head8_forward.1} parent=1 // pred_check
      _
    $region39: #{head8_forward.1} parent=1 // pred_check_branch
      %245 = sbr.rel (0) target = $region41
    $region40: #{head8_forward.1} parent=1 // pred_region
      _
    $region41: #{head8_forward.1} parent=1 // pred_fallthru
      _
    %246 = vsyncpa [#allocation3], 1
    %247 = vsyncpa [#allocation5], 1

</llo_original>
